<compile_context>
chip_gen: v7x
topology: tpu7x:2x2x1
jax: 0.10.0
libtpu: 0.0.40
codegen_flags: <defaults>
</compile_context>

<pallas_src>
import functools

import jax
import jax.numpy as jnp
from jax.experimental import pallas as pl
from jax.experimental.pallas import tpu as pltpu


TILE_BUDGET_BYTES = 3 * 1024 * 1024   # per-tile budget; 4 pipeline bufs ~12 MiB
MIN_SPLIT_BYTES = 1 * 1024 * 1024     # force >=2 parallel blocks above this


def _postproc_kernel(params_ref, x_ref, o_ref, *, num_channels, rows_aligned):
    """out = (x - bias[ch]) * inv_scale[ch], ch = global_row % num_channels.

    params_ref : SMEM (2*C,) f32 scalar-prefetch -- [0:C] = bias, [C:2C] = 1/scale.
    x_ref/o_ref: (BR, BS) VMEM tiles of the (N*C, H*W) array.
    """
    br = x_ref.shape[0]
    ch = jax.lax.broadcasted_iota(jnp.int32, (br, 1), 0)
    if not rows_aligned:
        # Only needed if the row block is not a multiple of C.
        ch = ch + pl.program_id(0) * br
    if (num_channels & (num_channels - 1)) == 0:
        ch = ch & (num_channels - 1)
    else:
        ch = ch % num_channels

    # Build per-row (BR, 1) bias / inv_scale columns from the C SMEM scalars.
    bias = jnp.zeros((br, 1), jnp.float32)
    inv_s = jnp.zeros((br, 1), jnp.float32)
    for c in range(num_channels):
        sel = ch == c
        bias = jnp.where(sel, params_ref[c], bias)
        inv_s = jnp.where(sel, params_ref[num_channels + c], inv_s)

    x = x_ref[...].astype(jnp.float32)
    o_ref[...] = ((x - bias) * inv_s).astype(o_ref.dtype)


def _sublane_unit(dtype):
    bits = jnp.dtype(dtype).itemsize * 8
    return max(8, 256 // bits)   # 8 for 32-bit, 16 for 16-bit, 32 for 8-bit


def _round_down(x, m):
    return (x // m) * m


def _pick_blocks(R, S, itemsize, unit, budget, min_split_bytes):
    """Byte-budget block picker: grow the lane axis toward full S first."""
    row_bytes = S * itemsize
    total = R * row_bytes

    if row_bytes * min(R, unit) <= budget:
        # Full-width rows fit in the budget: keep BS = S (contiguous DMA,
        # lane-dense stores) and take as many rows as fit.
        BS = S
        rows_fit = budget // row_bytes
        if rows_fit >= R:
            BR = R
        else:
            BR = max(unit, _round_down(rows_fit, unit))
    else:
        # Even one sublane-unit of full-S rows blows the budget: tile lanes.
        BR = R if R < unit else unit
        lanes_fit = max(128, _round_down(budget // (BR * itemsize), 128))
        BS = S if lanes_fit >= S else lanes_fit

    # Megacore: make sure a reasonably large problem exposes >=2 blocks along
    # a "parallel" grid axis so both v7x TensorCores get work.
    if total >= min_split_bytes and pl.cdiv(R, BR) * pl.cdiv(S, BS) < 2:
        if R >= 2 * unit and BR == R:
            BR = max(unit, _round_down(pl.cdiv(R, 2), unit))
        elif S >= 2 * 128 and BS == S:
            BS = max(128, _round_down(pl.cdiv(S, 2), 128))

    return BR, BS


@jax.jit
def sd15_vae_postprocess(x, scale_c, bias_c):
    """x: (N, C, H, W); scale_c/bias_c: (C,).  Returns (x - bias) / scale."""
    N, C, H, W = x.shape
    R, S = N * C, H * W
    x2d = x.reshape(R, S)

    # Fold the divide into a multiply; pack [bias | 1/scale] into one tiny
    # scalar-prefetch vector (single SMEM copy before the grid runs).
    params = jnp.concatenate(
        [bias_c.astype(jnp.float32), 1.0 / scale_c.astype(jnp.float32)]
    )

    itemsize = jnp.dtype(x.dtype).itemsize
    unit = _sublane_unit(x.dtype)
    BR, BS = _pick_blocks(R, S, itemsize, unit, TILE_BUDGET_BYTES, MIN_SPLIT_BYTES)
    grid = (pl.cdiv(R, BR), pl.cdiv(S, BS))

    kernel = functools.partial(
        _postproc_kernel, num_channels=C, rows_aligned=(BR % C == 0)
    )

    out2d = pl.pallas_call(
        kernel,
        out_shape=jax.ShapeDtypeStruct((R, S), x.dtype),
        grid_spec=pltpu.PrefetchScalarGridSpec(
            num_scalar_prefetch=1,                                   # params
            grid=grid,
            in_specs=[pl.BlockSpec((BR, BS), lambda i, j, p: (i, j))],  # x tile
            out_specs=pl.BlockSpec((BR, BS), lambda i, j, p: (i, j)),
        ),
        # Donate x2d's HBM buffer to the output (index 1 = x2d, after the
        # scalar-prefetch operand at index 0).
        input_output_aliases={1: 0},
        compiler_params=pltpu.CompilerParams(
            dimension_semantics=("parallel", "parallel"),
        ),
    )(params, x2d)

    return out2d.reshape(N, C, H, W)


def make_params(channel_wise_normalisation=False):
    if channel_wise_normalisation:
        scale = 0.5 / jnp.array([4.17, 4.62, 3.71, 3.28], dtype=jnp.float32)
        bias = -jnp.array([5.81, 3.25, 0.12, -2.15], dtype=jnp.float32) * scale
    else:
        scale = jnp.full((4,), 0.18215, dtype=jnp.float32)
        bias = jnp.zeros((4,), dtype=jnp.float32)
    return scale, bias


if __name__ == "__main__":
    key = jax.random.PRNGKey(0)
    # Small canonical shape plus a larger one that exercises the full-S block
    # path; both stay tiny enough to run instantly on any TPU.
    for shape in [(2, 4, 16, 16), (2, 4, 64, 64)]:
        key, sub = jax.random.split(key)
        x = jax.random.normal(sub, shape, dtype=jnp.float32)
        N, C, H, W = shape
        for cwn in (False, True):
            scale_c, bias_c = make_params(channel_wise_normalisation=cwn)
            out = jax.block_until_ready(sd15_vae_postprocess(x, scale_c, bias_c))

            # Reference mirrors the PyTorch (1, C, 1, 1) broadcast: (x - b) / s.
            # NOTE: kernel uses (x - b) * (1/s); up to ~1 ulp drift vs the
            # literal divide, well inside the test tolerance.
            ref = (x - bias_c.reshape(1, C, 1, 1)) / scale_c.reshape(1, C, 1, 1)
            assert out.shape == shape
            max_err = float(jnp.max(jnp.abs(out - ref)))
            assert jnp.allclose(out, ref, rtol=1e-5, atol=1e-5), max_err

    print("KERNEL_OK")
</pallas_src>

<mosaic_0001>
module attributes {stable_mosaic.version = 11 : i64} {
  func.func @_postproc_kernel(%arg0: i32, %arg1: i32, %arg2: memref<8xf32, #tpu.memory_space<smem>>, %arg3: memref<8x256xf32, #tpu.memory_space<vmem>>, %arg4: memref<8x256xf32, #tpu.memory_space<vmem>>) attributes {dimension_semantics = [#tpu.dimension_semantics<parallel>, #tpu.dimension_semantics<parallel>], iteration_bounds = array<i64: 1, 1>, scalar_prefetch = 1 : i64, scratch_operands = 0 : i64, tpu.core_type = #tpu.core_type<tc>, window_params = [{transform_indices = @transform_0, window_bounds = array<i64: 8, 256>}, {transform_indices = @transform_1, window_bounds = array<i64: 8, 256>}]} {
    %0 = tpu.iota {dimensions = array<i32: 0>} : vector<8x1xi32>
    %c3_i32 = arith.constant 3 : i32
    %1 = vector.broadcast %c3_i32 : i32 to vector<8x1xi32>
    %2 = arith.andi %0, %1 : vector<8x1xi32>
    %cst = arith.constant 0.000000e+00 : f32
    %3 = vector.broadcast %cst : f32 to vector<8x1xf32>
    %cst_0 = arith.constant 0.000000e+00 : f32
    %4 = vector.broadcast %cst_0 : f32 to vector<8x1xf32>
    %c0_i32 = arith.constant 0 : i32
    %5 = vector.broadcast %c0_i32 : i32 to vector<8x1xi32>
    %6 = arith.cmpi eq, %2, %5 : vector<8x1xi32>
    %c0 = arith.constant 0 : index
    %7 = memref.load %arg2[%c0] : memref<8xf32, #tpu.memory_space<smem>>
    %8 = vector.broadcast %7 : f32 to vector<8x1xf32>
    %9 = arith.select %6, %8, %3 : vector<8x1xi1>, vector<8x1xf32>
    %c4 = arith.constant 4 : index
    %10 = memref.load %arg2[%c4] : memref<8xf32, #tpu.memory_space<smem>>
    %11 = vector.broadcast %10 : f32 to vector<8x1xf32>
    %12 = arith.select %6, %11, %4 : vector<8x1xi1>, vector<8x1xf32>
    %c1_i32 = arith.constant 1 : i32
    %13 = vector.broadcast %c1_i32 : i32 to vector<8x1xi32>
    %14 = arith.cmpi eq, %2, %13 : vector<8x1xi32>
    %c1 = arith.constant 1 : index
    %15 = memref.load %arg2[%c1] : memref<8xf32, #tpu.memory_space<smem>>
    %16 = vector.broadcast %15 : f32 to vector<8x1xf32>
    %17 = arith.select %14, %16, %9 : vector<8x1xi1>, vector<8x1xf32>
    %c5 = arith.constant 5 : index
    %18 = memref.load %arg2[%c5] : memref<8xf32, #tpu.memory_space<smem>>
    %19 = vector.broadcast %18 : f32 to vector<8x1xf32>
    %20 = arith.select %14, %19, %12 : vector<8x1xi1>, vector<8x1xf32>
    %c2_i32 = arith.constant 2 : i32
    %21 = vector.broadcast %c2_i32 : i32 to vector<8x1xi32>
    %22 = arith.cmpi eq, %2, %21 : vector<8x1xi32>
    %c2 = arith.constant 2 : index
    %23 = memref.load %arg2[%c2] : memref<8xf32, #tpu.memory_space<smem>>
    %24 = vector.broadcast %23 : f32 to vector<8x1xf32>
    %25 = arith.select %22, %24, %17 : vector<8x1xi1>, vector<8x1xf32>
    %c6 = arith.constant 6 : index
    %26 = memref.load %arg2[%c6] : memref<8xf32, #tpu.memory_space<smem>>
    %27 = vector.broadcast %26 : f32 to vector<8x1xf32>
    %28 = arith.select %22, %27, %20 : vector<8x1xi1>, vector<8x1xf32>
    %c3_i32_1 = arith.constant 3 : i32
    %29 = vector.broadcast %c3_i32_1 : i32 to vector<8x1xi32>
    %30 = arith.cmpi eq, %2, %29 : vector<8x1xi32>
    %c3 = arith.constant 3 : index
    %31 = memref.load %arg2[%c3] : memref<8xf32, #tpu.memory_space<smem>>
    %32 = vector.broadcast %31 : f32 to vector<8x1xf32>
    %33 = arith.select %30, %32, %25 : vector<8x1xi1>, vector<8x1xf32>
    %c7 = arith.constant 7 : index
    %34 = memref.load %arg2[%c7] : memref<8xf32, #tpu.memory_space<smem>>
    %35 = vector.broadcast %34 : f32 to vector<8x1xf32>
    %36 = arith.select %30, %35, %28 : vector<8x1xi1>, vector<8x1xf32>
    %c0_2 = arith.constant 0 : index
    %c0_3 = arith.constant 0 : index
    %37 = vector.load %arg3[%c0_2, %c0_3] : memref<8x256xf32, #tpu.memory_space<vmem>>, vector<8x256xf32>
    %38 = vector.broadcast %33 : vector<8x1xf32> to vector<8x256xf32>
    %39 = arith.subf %37, %38 : vector<8x256xf32>
    %40 = vector.broadcast %36 : vector<8x1xf32> to vector<8x256xf32>
    %41 = arith.mulf %39, %40 : vector<8x256xf32>
    %c0_4 = arith.constant 0 : index
    %c0_5 = arith.constant 0 : index
    %42 = vector.load %arg4[%c0_4, %c0_5] : memref<8x256xf32, #tpu.memory_space<vmem>>, vector<8x256xf32>
    tpu.vector_store %arg4[%c0_4, %c0_5], %41 {strides = array<i32>} : memref<8x256xf32, #tpu.memory_space<vmem>>, vector<8x256xf32>,
    return
  }
  func.func @transform_0(%arg0: i32, %arg1: i32, %arg2: memref<8xf32, #tpu.memory_space<smem>>) -> (i32, i32) {
    %c0_i32 = arith.constant 0 : i32
    return %arg0, %arg1 : i32, i32
  }
  func.func @transform_1(%arg0: i32, %arg1: i32, %arg2: memref<8xf32, #tpu.memory_space<smem>>) -> (i32, i32) {
    %c0_i32 = arith.constant 0 : i32
    return %arg0, %arg1 : i32, i32
  }
}

</mosaic_0001>

<llo_original>
// kernel: sd15_vae_postprocess.1
$region0: #{sd15_vae_postprocess.1}
  #allocation0 [shape = 'u32[]', space=smem, size = 0x4, offset = 0x4, fixed_abs, tag = 'smem constant byte address 0x4 - core index']
  #allocation1 [shape = 'u32[144,128]{1,0:T(1,128)}', space=vmem, size = 0x12000, scoped, tag = 'internal scratch']
  #allocation2 [shape = 's32[1]{0}', space=sflag, size = 0x4, scoped, tag = 'scoped memory for sd15_vae_postprocess.1']
  #allocation3 [shape = 'u8[512]{0}', space=smem, size = 0x200, scoped, tag = 'prefetched SMEM operand 0']
  %s0 = inlined_call_operand.vmem [shape: f32[8], index: 0, kind: input, shape index: {}]
  %s1 = inlined_call_operand.vmem [shape: f32[8,256], index: 1, kind: input, shape index: {}, may-alias: {1,2}]
  %s2 = inlined_call_operand.vmem [shape: f32[8,256], index: 2, kind: output, shape index: {}, may-alias: {1,2}]
  %s3 = sld [smem:[#allocation0]]
  $region14: #{sd15_vae_postprocess.1} parent=0
    _
  %s5 = ssub.s32 1, %s3
  %s6 = scalar_select 0, %s5, %s3
  %s7 = sshll.u32 %s0, 4
  %s8 = int_to_ptr.vmem [resolvable:$true] %s7
  %10 = dma.vmem_to_smem %s8, 16, [#allocation3], [#allocation2]
  %11 = dma.done [#allocation2], 16
  %12 = sfence
  // Predicated region
  $region2: #{sd15_vae_postprocess.1} parent=0 // pred_check
    _
  $region3: #{sd15_vae_postprocess.1} parent=0 // pred_check_branch
    %14 = sbr.rel (0) target = $region5
  $region4: #{sd15_vae_postprocess.1} parent=0 // pred_region
    _
  $region5: #{sd15_vae_postprocess.1} parent=0 // pred_fallthru
    _
  %v15 = vlaneseq
  %v16 = vshrl.u32 %v15, 7
  %v17 = vand.u32 %v16, 3
  %vm18 = vcmp.eq.s32.totalorder %v17, 0
  %s19 = sld [smem:[#allocation3]]
  %v20 = vstv %s19
  %v21 = vsel %vm18, %v20, 0.0
  %s22 = sld [smem:[#allocation3 + $0x4]]
  %v23 = vstv %s22
  %v24 = vsel %vm18, %v23, 0.0
  %vm25 = vcmp.eq.s32.totalorder %v17, 1
  %s26 = sld [smem:[#allocation3 + $0x1]]
  %v27 = vstv %s26
  %v28 = vsel %vm25, %v27, %v21
  %s29 = sld [smem:[#allocation3 + $0x5]]
  %v30 = vstv %s29
  %v31 = vsel %vm25, %v30, %v24
  %vm32 = vcmp.eq.s32.totalorder %v17, 2
  %s33 = sld [smem:[#allocation3 + $0x2]]
  %v34 = vstv %s33
  %v35 = vsel %vm32, %v34, %v28
  %s36 = sld [smem:[#allocation3 + $0x6]]
  %v37 = vstv %s36
  %v38 = vsel %vm32, %v37, %v31
  %vm39 = vcmp.eq.s32.totalorder %v17, 3
  %s40 = sld [smem:[#allocation3 + $0x3]]
  %v41 = vstv %s40
  %v42 = vsel %vm39, %v41, %v35
  %s43 = sld [smem:[#allocation3 + $0x7]]
  %v44 = vstv %s43
  %v45 = vsel %vm39, %v44, %v38
  %v46 = vld [vmem:[%s1] sm:$0xff]
  %v47 = vld [vmem:[%s1 + $0x8] sm:$0xff]
  %v48 = vsub.f32 %v46, %v42
  %v49 = vsub.f32 %v47, %v42
  %v50 = vmul.f32 %v48, %v45
  %v51 = vmul.f32 %v49, %v45
  %52 = vst [vmem:[%s2] sm:$0xff] %v50
  %53 = vst [vmem:[%s2 + $0x8] sm:$0xff] %v51
  // Predicated region
  $region6: #{sd15_vae_postprocess.1} parent=0 // pred_check
    _
  $region7: #{sd15_vae_postprocess.1} parent=0 // pred_check_branch
    %55 = sbr.rel (0) target = $region9
  $region8: #{sd15_vae_postprocess.1} parent=0 // pred_region
    _
  $region9: #{sd15_vae_postprocess.1} parent=0 // pred_fallthru
    _
  // Predicated region
  $region10: #{sd15_vae_postprocess.1} parent=0 // pred_check
    _
  $region11: #{sd15_vae_postprocess.1} parent=0 // pred_check_branch
    %57 = sbr.rel (0) target = $region13
  $region12: #{sd15_vae_postprocess.1} parent=0 // pred_region
    _
  $region13: #{sd15_vae_postprocess.1} parent=0 // pred_fallthru
    _

</llo_original>
